<compile_context>
chip_gen: v7x
topology: tpu7x:2x2x1
jax: 0.10.0
libtpu: 0.0.40
codegen_flags: <defaults>
</compile_context>

<pallas_src>
import math

import jax
import jax.numpy as jnp
from jax.experimental import pallas as pl
from jax.experimental.pallas import tpu as pltpu

# ---------------- config (ByteModelConfig analogue, small synthetic sizes) ---------------
B = 2            # batch
T = 8            # sequence length
D = 32           # model_dim
NUM_HEADS = 4
HEAD_DIM = D // NUM_HEADS
HIDDEN = 64      # ByteMLP hidden_dim
NUM_LAYERS = 2
EPS = 1e-5                                     # layer_norm_eps
RESID_SCALE = 1.0 / math.sqrt(2 * NUM_LAYERS)  # DeepNorm
LS_INIT = 1e-4                                 # layerscale_init

N = B * T               # rows handled by the single kernel invocation
HN = NUM_HEADS * N      # all heads' score columns laid out side by side
DP = 128                # model dim zero-padded to full lane width (lane-dense stores)


# ---------------------------------- Pallas kernel ----------------------------------------
def decoder_layer_kernel(x_ref, mask_ref, mhead_ref, nl_ref,
                         wqkv_ref, wo_ref, w13_ref, w2_ref, o_ref):
    bf16 = jnp.bfloat16
    f32 = jnp.float32

    x = x_ref[...]                                   # (N, D) f32
    # Place x into the lane-dense padded layout; columns D..DP-1 stay exactly zero
    # through the whole layer (all padded weight rows/cols are zero).
    x_p = jnp.concatenate([x, jnp.zeros((N, DP - D), f32)], axis=1)   # (N, DP)

    nl = nl_ref[...]                                 # (4, DP) f32: wna / wnf / lsa / lsm
    wna = nl[0:1, :]
    wnf = nl[1:2, :]
    lsa = nl[2:3, :]                                 # already includes RESID_SCALE
    lsm = nl[3:4, :]

    mhead = mhead_ref[...]                           # (HN, D) bf16 0/1 head indicator
    mask = mask_ref[...]                             # (N, HN) bf16 additive mask

    inv_d = jnp.float32(1.0 / D)

    def rmsnorm(v, w):
        # Padded columns are zero, so the sum over DP equals the sum over the true D;
        # divide by the true model dim.
        ms = jnp.sum(v * v, axis=-1, keepdims=True) * inv_d
        return v * jax.lax.rsqrt(ms + EPS) * w

    # ---------------- attention branch ----------------
    h1 = rmsnorm(x_p, wna)                                            # (N, DP) f32
    qkv = jnp.dot(h1.astype(bf16), wqkv_ref[...],                     # (N, 3D)
                  preferred_element_type=f32)                         # 1/sqrt(HEAD_DIM) in Q
    q = qkv[:, :D].astype(bf16)
    k = qkv[:, D:2 * D].astype(bf16)
    v = qkv[:, 2 * D:].astype(bf16)

    # Replicate K/V once per head along rows, mask each replica to its head's slice of D.
    # Built directly in (HN, D) form -> no in-kernel transpose, single indicator matrix.
    kh = jnp.concatenate([k] * NUM_HEADS, axis=0) * mhead             # (HN, D) bf16
    vh = jnp.concatenate([v] * NUM_HEADS, axis=0) * mhead             # (HN, D) bf16

    # Scores for all heads in one MXU pass: contract D with the head-masked K rows (A·Bᵀ).
    s = jax.lax.dot_general(q, kh, (((1,), (1,)), ((), ())),
                            preferred_element_type=f32)               # (N, HN) f32
    s = s + mask.astype(f32)

    # Per-head-block softmax: block max + VPU/XLU row-sum (no bones matmul).
    p_blocks = []
    for h in range(NUM_HEADS):                                        # static, NUM_HEADS small
        blk = s[:, h * N:(h + 1) * N]                                 # (N, N) f32
        m_h = jnp.max(blk, axis=-1, keepdims=True)
        e_h = jnp.exp(blk - m_h)                                      # f32 softmax math
        d_h = jnp.sum(e_h, axis=-1, keepdims=True)                    # >= 1 by construction
        p_blocks.append(e_h * pl.reciprocal(d_h, approx=True))
    p = jnp.concatenate(p_blocks, axis=1).astype(bf16)                # (N, HN)

    attn = jnp.dot(p, vh, preferred_element_type=f32)                 # (N, D): heads merged
    attn_out = jnp.dot(attn.astype(bf16), wo_ref[...],
                       preferred_element_type=f32)                    # (N, DP)

    x1 = x_p + lsa * attn_out                                         # lsa includes resid_scale

    # ---------------- SwiGLU MLP ----------------
    h2 = rmsnorm(x1, wnf)
    gu = jnp.dot(h2.astype(bf16), w13_ref[...],                       # (N, 2*HIDDEN) lane-dense
                 preferred_element_type=f32)
    g = gu[:, :HIDDEN]
    u = gu[:, HIDDEN:]
    act = g * jax.lax.logistic(g) * u                                 # silu(g) * u, f32
    ff = jnp.dot(act.astype(bf16), w2_ref[...],
                 preferred_element_type=f32)                          # (N, DP)

    o_ref[...] = x1 + lsm * ff                                        # full-lane (N, 128) store


# ------------------------ host-side one-time fusion of weights & constants ----------------
def prepare_params(params, additive_mask):
    wna, wnf, wq, wk, wv, wo, w1, w2, w3, ls_a, ls_m = params
    scale = 1.0 / math.sqrt(HEAD_DIM)

    pad_rows = lambda w: jnp.pad(w, ((0, DP - D), (0, 0)))   # (D, X) -> (DP, X)
    pad_cols = lambda w: jnp.pad(w, ((0, 0), (0, DP - D)))   # (X, D) -> (X, DP)

    wqkv = pad_rows(jnp.concatenate([wq * scale, wk, wv], axis=1)).astype(jnp.bfloat16)  # (DP,3D)
    w13 = pad_rows(jnp.concatenate([w1, w3], axis=1)).astype(jnp.bfloat16)               # (DP,2H)
    wo_p = pad_cols(wo).astype(jnp.bfloat16)                                             # (D, DP)
    w2_p = pad_cols(w2).astype(jnp.bfloat16)                                             # (H, DP)

    # Packed norm / layerscale rows: [wna, wnf, lsa, lsm], zero-padded to DP (one input).
    nl = jnp.concatenate([wna, wnf, ls_a * RESID_SCALE, ls_m * RESID_SCALE], axis=0)     # (4, D)
    nl = jnp.pad(nl, ((0, 0), (0, DP - D))).astype(jnp.float32)                          # (4, DP)

    # Single head-indicator matrix reused for both K and V layouts:
    #   m_head[h*N + s, d] = 1 iff model-dim column d belongs to head h.
    r_head = jnp.arange(HN) // N
    d_head = jnp.arange(D) // HEAD_DIM
    m_head = (r_head[:, None] == d_head[None, :]).astype(jnp.bfloat16)                   # (HN, D)

    # Additive mask, batch folded into rows (forbid cross-batch attention) and tiled per
    # head along columns to match the (N, HN) score layout.  Constant for fixed B/T, so it
    # is built once here, not per call.
    row_b = jnp.arange(N)[:, None] // T
    col_b = jnp.arange(N)[None, :] // T
    big = jnp.where(row_b == col_b, jnp.tile(additive_mask, (B, B)), jnp.float32(-1e9))  # (N, N)
    mask_hn = jnp.tile(big, (1, NUM_HEADS)).astype(jnp.bfloat16)                         # (N, HN)

    return (mask_hn, m_head, nl, wqkv, wo_p, w13, w2_p)


# ---------------------------------- wrapper ------------------------------------------------
def byte_decoder_layer(x, fused):
    mask_hn, m_head, nl, wqkv, wo_p, w13, w2_p = fused

    x2d = x.reshape(N, D)
    vmem = pl.BlockSpec(memory_space=pltpu.MemorySpace.VMEM)

    out_p = pl.pallas_call(
        decoder_layer_kernel,
        out_shape=jax.ShapeDtypeStruct((N, DP), jnp.float32),
        in_specs=[vmem] * 8,
        out_specs=vmem,
    )(x2d, mask_hn, m_head, nl, wqkv, wo_p, w13, w2_p)

    return out_p[:, :D].reshape(B, T, D)


# ---------------------------------- reference (pure JAX, f32, unfused) ---------------------
def reference(x, mask, params):
    wna, wnf, wq, wk, wv, wo, w1, w2, w3, ls_a, ls_m = params

    def rmsnorm(v, w):
        return v * jax.lax.rsqrt(jnp.mean(v * v, -1, keepdims=True) + EPS) * w

    h = rmsnorm(x, wna)
    q = (h @ wq).reshape(B, T, NUM_HEADS, HEAD_DIM).transpose(0, 2, 1, 3)
    k = (h @ wk).reshape(B, T, NUM_HEADS, HEAD_DIM).transpose(0, 2, 1, 3)
    v = (h @ wv).reshape(B, T, NUM_HEADS, HEAD_DIM).transpose(0, 2, 1, 3)
    s = jnp.einsum('bhqd,bhkd->bhqk', q, k) / math.sqrt(HEAD_DIM) + mask
    p = jax.nn.softmax(s, axis=-1)
    a = jnp.einsum('bhqk,bhkd->bhqd', p, v).transpose(0, 2, 1, 3).reshape(B, T, D)
    attn_out = a @ wo
    x1 = x + ls_a * attn_out * RESID_SCALE
    h2 = rmsnorm(x1, wnf)
    ff = (jax.nn.silu(h2 @ w1) * (h2 @ w3)) @ w2
    return x1 + ls_m * ff * RESID_SCALE


# ---------------------------------- main ---------------------------------------------------
if __name__ == "__main__":
    key = jax.random.PRNGKey(0)
    keys = jax.random.split(key, 12)

    x = jax.random.normal(keys[0], (B, T, D), dtype=jnp.float32)

    init = lambda k, shape, sc: jax.random.normal(k, shape, dtype=jnp.float32) * sc
    wq = init(keys[1], (D, D), 0.02)
    wk = init(keys[2], (D, D), 0.02)
    wv = init(keys[3], (D, D), 0.02)
    wo = init(keys[4], (D, D), 0.02)
    w1 = init(keys[5], (D, HIDDEN), 0.02)
    w2 = init(keys[6], (HIDDEN, D), 0.02)
    w3 = init(keys[7], (D, HIDDEN), 0.02)
    wna = jnp.ones((1, D), dtype=jnp.float32)            # RMSNorm weights
    wnf = jnp.ones((1, D), dtype=jnp.float32)
    ls_a = jnp.full((1, D), LS_INIT, dtype=jnp.float32)  # LayerScale gammas
    ls_m = jnp.full((1, D), LS_INIT, dtype=jnp.float32)

    params = (wna, wnf, wq, wk, wv, wo, w1, w2, w3, ls_a, ls_m)

    # Causal additive mask (T, T): 0 on/below diagonal, large negative above.
    causal = jnp.tril(jnp.ones((T, T), dtype=jnp.float32))
    additive_mask = jnp.where(causal > 0, 0.0, -1e9).astype(jnp.float32)

    fused = prepare_params(params, additive_mask)   # one-time weight fusion / padding / mask

    out = byte_decoder_layer(x, fused)
    out = jax.block_until_ready(out)

    ref = reference(x, additive_mask, params)
    assert out.shape == (B, T, D)
    err = jnp.max(jnp.abs(out - ref))
    # bf16 matmul operands + approx reciprocal; errors further suppressed by the 1e-4
    # LayerScale on the residual branches, so a 1e-4 tolerance is comfortable.
    assert jnp.allclose(out, ref, atol=1e-4, rtol=1e-4), f"max abs err {err}"

    print("KERNEL_OK")
</pallas_src>

<mosaic_0001>
module attributes {stable_mosaic.version = 11 : i64} {
  func.func @decoder_layer_kernel(%arg0: memref<16x32xf32, #tpu.memory_space<vmem>>, %arg1: memref<16x64xbf16, #tpu.memory_space<vmem>>, %arg2: memref<64x32xbf16, #tpu.memory_space<vmem>>, %arg3: memref<4x128xf32, #tpu.memory_space<vmem>>, %arg4: memref<128x96xbf16, #tpu.memory_space<vmem>>, %arg5: memref<32x128xbf16, #tpu.memory_space<vmem>>, %arg6: memref<128x128xbf16, #tpu.memory_space<vmem>>, %arg7: memref<64x128xbf16, #tpu.memory_space<vmem>>, %arg8: memref<16x128xf32, #tpu.memory_space<vmem>>) attributes {dimension_semantics = [], scalar_prefetch = 0 : i64, scratch_operands = 0 : i64, tpu.core_type = #tpu.core_type<tc>} {
    %c0 = arith.constant 0 : index
    %c0_0 = arith.constant 0 : index
    %0 = vector.load %arg0[%c0, %c0_0] : memref<16x32xf32, #tpu.memory_space<vmem>>, vector<16x32xf32>
    %cst = arith.constant 0.000000e+00 : f32
    %1 = vector.broadcast %cst : f32 to vector<16x96xf32>
    %2 = tpu.concatenate %0, %1 in 1 : vector<16x32xf32>, vector<16x96xf32> -> vector<16x128xf32>
    %c0_1 = arith.constant 0 : index
    %c0_2 = arith.constant 0 : index
    %3 = vector.load %arg3[%c0_1, %c0_2] : memref<4x128xf32, #tpu.memory_space<vmem>>, vector<4x128xf32>
    %4 = vector.extract_strided_slice %3 {offsets = [0, 0], sizes = [1, 128], strides = [1, 1]} : vector<4x128xf32> to vector<1x128xf32>
    %5 = vector.extract_strided_slice %3 {offsets = [1, 0], sizes = [1, 128], strides = [1, 1]} : vector<4x128xf32> to vector<1x128xf32>
    %6 = vector.extract_strided_slice %3 {offsets = [2, 0], sizes = [1, 128], strides = [1, 1]} : vector<4x128xf32> to vector<1x128xf32>
    %7 = vector.extract_strided_slice %3 {offsets = [3, 0], sizes = [1, 128], strides = [1, 1]} : vector<4x128xf32> to vector<1x128xf32>
    %c0_3 = arith.constant 0 : index
    %c0_4 = arith.constant 0 : index
    %8 = vector.load %arg2[%c0_3, %c0_4] : memref<64x32xbf16, #tpu.memory_space<vmem>>, vector<64x32xbf16>
    %c0_5 = arith.constant 0 : index
    %c0_6 = arith.constant 0 : index
    %9 = vector.load %arg1[%c0_5, %c0_6] : memref<16x64xbf16, #tpu.memory_space<vmem>>, vector<16x64xbf16>
    %10 = arith.mulf %2, %2 : vector<16x128xf32>
    %cst_7 = arith.constant dense<0.000000e+00> : vector<16xf32>
    %11 = vector.multi_reduction <add>, %10, %cst_7 [1] : vector<16x128xf32> to vector<16xf32>
    %12 = vector.shape_cast %11 : vector<16xf32> to vector<16x1xf32>
    %cst_8 = arith.constant 3.125000e-02 : f32
    %13 = vector.broadcast %cst_8 : f32 to vector<16x1xf32>
    %14 = arith.mulf %12, %13 : vector<16x1xf32>
    %cst_9 = arith.constant 9.99999974E-6 : f32
    %15 = vector.broadcast %cst_9 : f32 to vector<16x1xf32>
    %16 = arith.addf %14, %15 : vector<16x1xf32>
    %17 = math.rsqrt %16 : vector<16x1xf32>
    %18 = vector.broadcast %17 : vector<16x1xf32> to vector<16x128xf32>
    %19 = arith.mulf %2, %18 : vector<16x128xf32>
    %20 = vector.broadcast %4 : vector<1x128xf32> to vector<16x128xf32>
    %21 = arith.mulf %19, %20 : vector<16x128xf32>
    %22 = arith.truncf %21 : vector<16x128xf32> to vector<16x128xbf16>
    %c0_10 = arith.constant 0 : index
    %c0_11 = arith.constant 0 : index
    %23 = vector.load %arg4[%c0_10, %c0_11] : memref<128x96xbf16, #tpu.memory_space<vmem>>, vector<128x96xbf16>
    %cst_12 = arith.constant dense<0.000000e+00> : vector<16x96xf32>
    %24 = tpu.matmul %22, %23, %cst_12 {dimension_numbers = #tpu.dot_dimension_numbers<[1], [0], [0], [1], [0, 0, 1, 1], [], []>} : vector<16x128xbf16>, vector<128x96xbf16>, vector<16x96xf32> -> vector<16x96xf32>
    %25 = vector.extract_strided_slice %24 {offsets = [0, 0], sizes = [16, 32], strides = [1, 1]} : vector<16x96xf32> to vector<16x32xf32>
    %26 = arith.truncf %25 : vector<16x32xf32> to vector<16x32xbf16>
    %27 = vector.extract_strided_slice %24 {offsets = [0, 32], sizes = [16, 32], strides = [1, 1]} : vector<16x96xf32> to vector<16x32xf32>
    %28 = arith.truncf %27 : vector<16x32xf32> to vector<16x32xbf16>
    %29 = vector.extract_strided_slice %24 {offsets = [0, 64], sizes = [16, 32], strides = [1, 1]} : vector<16x96xf32> to vector<16x32xf32>
    %30 = arith.truncf %29 : vector<16x32xf32> to vector<16x32xbf16>
    %31 = tpu.concatenate %28, %28, %28, %28 in 0 : vector<16x32xbf16>, vector<16x32xbf16>, vector<16x32xbf16>, vector<16x32xbf16> -> vector<64x32xbf16>
    %32 = arith.mulf %31, %8 : vector<64x32xbf16>
    %33 = tpu.concatenate %30, %30, %30, %30 in 0 : vector<16x32xbf16>, vector<16x32xbf16>, vector<16x32xbf16>, vector<16x32xbf16> -> vector<64x32xbf16>
    %34 = arith.mulf %33, %8 : vector<64x32xbf16>
    %cst_13 = arith.constant dense<0.000000e+00> : vector<16x64xf32>
    %35 = tpu.matmul %26, %32, %cst_13 {dimension_numbers = #tpu.dot_dimension_numbers<[1], [1], [0], [0], [0, 0, 1, 0], [], []>} : vector<16x32xbf16>, vector<64x32xbf16>, vector<16x64xf32> -> vector<16x64xf32>
    %36 = arith.extf %9 : vector<16x64xbf16> to vector<16x64xf32>
    %37 = arith.addf %35, %36 : vector<16x64xf32>
    %38 = vector.extract_strided_slice %37 {offsets = [0, 0], sizes = [16, 16], strides = [1, 1]} : vector<16x64xf32> to vector<16x16xf32>
    %cst_14 = arith.constant dense<0xFF800000> : vector<16xf32>
    %39 = vector.multi_reduction <maximumf>, %38, %cst_14 [1] : vector<16x16xf32> to vector<16xf32>
    %40 = vector.shape_cast %39 : vector<16xf32> to vector<16x1xf32>
    %41 = vector.broadcast %40 : vector<16x1xf32> to vector<16x16xf32>
    %42 = arith.subf %38, %41 : vector<16x16xf32>
    %43 = math.exp %42 : vector<16x16xf32>
    %cst_15 = arith.constant dense<0.000000e+00> : vector<16xf32>
    %44 = vector.multi_reduction <add>, %43, %cst_15 [1] : vector<16x16xf32> to vector<16xf32>
    %45 = vector.shape_cast %44 : vector<16xf32> to vector<16x1xf32>
    %46 = tpu.reciprocal %45 {approx = true} : vector<16x1xf32> -> vector<16x1xf32>
    %47 = vector.broadcast %46 : vector<16x1xf32> to vector<16x16xf32>
    %48 = arith.mulf %43, %47 : vector<16x16xf32>
    %49 = vector.extract_strided_slice %37 {offsets = [0, 16], sizes = [16, 16], strides = [1, 1]} : vector<16x64xf32> to vector<16x16xf32>
    %cst_16 = arith.constant dense<0xFF800000> : vector<16xf32>
    %50 = vector.multi_reduction <maximumf>, %49, %cst_16 [1] : vector<16x16xf32> to vector<16xf32>
    %51 = vector.shape_cast %50 : vector<16xf32> to vector<16x1xf32>
    %52 = vector.broadcast %51 : vector<16x1xf32> to vector<16x16xf32>
    %53 = arith.subf %49, %52 : vector<16x16xf32>
    %54 = math.exp %53 : vector<16x16xf32>
    %cst_17 = arith.constant dense<0.000000e+00> : vector<16xf32>
    %55 = vector.multi_reduction <add>, %54, %cst_17 [1] : vector<16x16xf32> to vector<16xf32>
    %56 = vector.shape_cast %55 : vector<16xf32> to vector<16x1xf32>
    %57 = tpu.reciprocal %56 {approx = true} : vector<16x1xf32> -> vector<16x1xf32>
    %58 = vector.broadcast %57 : vector<16x1xf32> to vector<16x16xf32>
    %59 = arith.mulf %54, %58 : vector<16x16xf32>
    %60 = vector.extract_strided_slice %37 {offsets = [0, 32], sizes = [16, 16], strides = [1, 1]} : vector<16x64xf32> to vector<16x16xf32>
    %cst_18 = arith.constant dense<0xFF800000> : vector<16xf32>
    %61 = vector.multi_reduction <maximumf>, %60, %cst_18 [1] : vector<16x16xf32> to vector<16xf32>
    %62 = vector.shape_cast %61 : vector<16xf32> to vector<16x1xf32>
    %63 = vector.broadcast %62 : vector<16x1xf32> to vector<16x16xf32>
    %64 = arith.subf %60, %63 : vector<16x16xf32>
    %65 = math.exp %64 : vector<16x16xf32>
    %cst_19 = arith.constant dense<0.000000e+00> : vector<16xf32>
    %66 = vector.multi_reduction <add>, %65, %cst_19 [1] : vector<16x16xf32> to vector<16xf32>
    %67 = vector.shape_cast %66 : vector<16xf32> to vector<16x1xf32>
    %68 = tpu.reciprocal %67 {approx = true} : vector<16x1xf32> -> vector<16x1xf32>
    %69 = vector.broadcast %68 : vector<16x1xf32> to vector<16x16xf32>
    %70 = arith.mulf %65, %69 : vector<16x16xf32>
    %71 = vector.extract_strided_slice %37 {offsets = [0, 48], sizes = [16, 16], strides = [1, 1]} : vector<16x64xf32> to vector<16x16xf32>
    %cst_20 = arith.constant dense<0xFF800000> : vector<16xf32>
    %72 = vector.multi_reduction <maximumf>, %71, %cst_20 [1] : vector<16x16xf32> to vector<16xf32>
    %73 = vector.shape_cast %72 : vector<16xf32> to vector<16x1xf32>
    %74 = vector.broadcast %73 : vector<16x1xf32> to vector<16x16xf32>
    %75 = arith.subf %71, %74 : vector<16x16xf32>
    %76 = math.exp %75 : vector<16x16xf32>
    %cst_21 = arith.constant dense<0.000000e+00> : vector<16xf32>
    %77 = vector.multi_reduction <add>, %76, %cst_21 [1] : vector<16x16xf32> to vector<16xf32>
    %78 = vector.shape_cast %77 : vector<16xf32> to vector<16x1xf32>
    %79 = tpu.reciprocal %78 {approx = true} : vector<16x1xf32> -> vector<16x1xf32>
    %80 = vector.broadcast %79 : vector<16x1xf32> to vector<16x16xf32>
    %81 = arith.mulf %76, %80 : vector<16x16xf32>
    %82 = tpu.concatenate %48, %59, %70, %81 in 1 : vector<16x16xf32>, vector<16x16xf32>, vector<16x16xf32>, vector<16x16xf32> -> vector<16x64xf32>
    %83 = arith.truncf %82 : vector<16x64xf32> to vector<16x64xbf16>
    %cst_22 = arith.constant dense<0.000000e+00> : vector<16x32xf32>
    %84 = tpu.matmul %83, %34, %cst_22 {dimension_numbers = #tpu.dot_dimension_numbers<[1], [0], [0], [1], [0, 0, 1, 1], [], []>} : vector<16x64xbf16>, vector<64x32xbf16>, vector<16x32xf32> -> vector<16x32xf32>
    %85 = arith.truncf %84 : vector<16x32xf32> to vector<16x32xbf16>
    %c0_23 = arith.constant 0 : index
    %c0_24 = arith.constant 0 : index
    %86 = vector.load %arg5[%c0_23, %c0_24] : memref<32x128xbf16, #tpu.memory_space<vmem>>, vector<32x128xbf16>
    %cst_25 = arith.constant dense<0.000000e+00> : vector<16x128xf32>
    %87 = tpu.matmul %85, %86, %cst_25 {dimension_numbers = #tpu.dot_dimension_numbers<[1], [0], [0], [1], [0, 0, 1, 1], [], []>} : vector<16x32xbf16>, vector<32x128xbf16>, vector<16x128xf32> -> vector<16x128xf32>
    %88 = vector.broadcast %6 : vector<1x128xf32> to vector<16x128xf32>
    %89 = arith.mulf %88, %87 : vector<16x128xf32>
    %90 = arith.addf %2, %89 : vector<16x128xf32>
    %91 = arith.mulf %90, %90 : vector<16x128xf32>
    %cst_26 = arith.constant dense<0.000000e+00> : vector<16xf32>
    %92 = vector.multi_reduction <add>, %91, %cst_26 [1] : vector<16x128xf32> to vector<16xf32>
    %93 = vector.shape_cast %92 : vector<16xf32> to vector<16x1xf32>
    %cst_27 = arith.constant 3.125000e-02 : f32
    %94 = vector.broadcast %cst_27 : f32 to vector<16x1xf32>
    %95 = arith.mulf %93, %94 : vector<16x1xf32>
    %cst_28 = arith.constant 9.99999974E-6 : f32
    %96 = vector.broadcast %cst_28 : f32 to vector<16x1xf32>
    %97 = arith.addf %95, %96 : vector<16x1xf32>
    %98 = math.rsqrt %97 : vector<16x1xf32>
    %99 = vector.broadcast %98 : vector<16x1xf32> to vector<16x128xf32>
    %100 = arith.mulf %90, %99 : vector<16x128xf32>
    %101 = vector.broadcast %5 : vector<1x128xf32> to vector<16x128xf32>
    %102 = arith.mulf %100, %101 : vector<16x128xf32>
    %103 = arith.truncf %102 : vector<16x128xf32> to vector<16x128xbf16>
    %c0_29 = arith.constant 0 : index
    %c0_30 = arith.constant 0 : index
    %104 = vector.load %arg6[%c0_29, %c0_30] : memref<128x128xbf16, #tpu.memory_space<vmem>>, vector<128x128xbf16>
    %cst_31 = arith.constant dense<0.000000e+00> : vector<16x128xf32>
    %105 = tpu.matmul %103, %104, %cst_31 {dimension_numbers = #tpu.dot_dimension_numbers<[1], [0], [0], [1], [0, 0, 1, 1], [], []>} : vector<16x128xbf16>, vector<128x128xbf16>, vector<16x128xf32> -> vector<16x128xf32>
    %106 = vector.extract_strided_slice %105 {offsets = [0, 0], sizes = [16, 64], strides = [1, 1]} : vector<16x128xf32> to vector<16x64xf32>
    %107 = vector.extract_strided_slice %105 {offsets = [0, 64], sizes = [16, 64], strides = [1, 1]} : vector<16x128xf32> to vector<16x64xf32>
    %108 = arith.negf %106 : vector<16x64xf32>
    %109 = math.exp %108 : vector<16x64xf32>
    %cst_32 = arith.constant 1.000000e+00 : f32
    %110 = vector.broadcast %cst_32 : f32 to vector<16x64xf32>
    %111 = arith.addf %110, %109 : vector<16x64xf32>
    %112 = arith.divf %110, %111 : vector<16x64xf32>
    %113 = arith.mulf %106, %112 : vector<16x64xf32>
    %114 = arith.mulf %113, %107 : vector<16x64xf32>
    %115 = arith.truncf %114 : vector<16x64xf32> to vector<16x64xbf16>
    %c0_33 = arith.constant 0 : index
    %c0_34 = arith.constant 0 : index
    %116 = vector.load %arg7[%c0_33, %c0_34] : memref<64x128xbf16, #tpu.memory_space<vmem>>, vector<64x128xbf16>
    %cst_35 = arith.constant dense<0.000000e+00> : vector<16x128xf32>
    %117 = tpu.matmul %115, %116, %cst_35 {dimension_numbers = #tpu.dot_dimension_numbers<[1], [0], [0], [1], [0, 0, 1, 1], [], []>} : vector<16x64xbf16>, vector<64x128xbf16>, vector<16x128xf32> -> vector<16x128xf32>
    %118 = vector.broadcast %7 : vector<1x128xf32> to vector<16x128xf32>
    %119 = arith.mulf %118, %117 : vector<16x128xf32>
    %120 = arith.addf %90, %119 : vector<16x128xf32>
    %c0_36 = arith.constant 0 : index
    %c0_37 = arith.constant 0 : index
    %121 = vector.load %arg8[%c0_36, %c0_37] : memref<16x128xf32, #tpu.memory_space<vmem>>, vector<16x128xf32>
    tpu.vector_store %arg8[%c0_36, %c0_37], %120 {strides = array<i32>} : memref<16x128xf32, #tpu.memory_space<vmem>>, vector<16x128xf32>,
    return
  }
}

</mosaic_0001>

<llo_original>
// kernel: tpu_custom_call.1
$region0: #{tpu_custom_call.1}
  #allocation0 [shape = 'u32[]', space=smem, size = 0x4, offset = 0x4, fixed_abs, tag = 'smem constant byte address 0x4 - core index']
  #allocation1 [shape = 'u32[144,128]{1,0:T(1,128)}', space=vmem, size = 0x12000, scoped, tag = 'internal scratch']
  %s0 = inlined_call_operand.vmem [shape: f32[16,32], index: 0, kind: input, shape index: {}]
  %s1 = inlined_call_operand.hbm [shape: bf16[16,64], index: 1, kind: input, shape index: {}]
  %s2 = inlined_call_operand.vmem [shape: bf16[64,32], index: 2, kind: input, shape index: {}]
  %s3 = inlined_call_operand.hbm [shape: f32[4,128], index: 3, kind: input, shape index: {}]
  %s4 = inlined_call_operand.vmem [shape: bf16[128,96], index: 4, kind: input, shape index: {}]
  %s5 = inlined_call_operand.vmem [shape: bf16[32,128], index: 5, kind: input, shape index: {}]
  %s6 = inlined_call_operand.vmem [shape: bf16[128,128], index: 6, kind: input, shape index: {}]
  %s7 = inlined_call_operand.vmem [shape: bf16[64,128], index: 7, kind: input, shape index: {}]
  %s8 = inlined_call_operand.hbm [shape: f32[16,128], index: 8, kind: output, shape index: {}]
  %s9 = sld [smem:[#allocation0]]
  $region50: #{tpu_custom_call.1} parent=0
    _
  %s11 = ssub.s32 1, %s9
  %s12 = scalar_select 0, %s11, %s9
  $region1: #{tpu_custom_call.1} parent=0
    #allocation2 [shape = 'u8[4096]{0}', space=vmem, size = 0x1000, scoped, tag = 'input window, operand 1, single buffered']
    #allocation3 [shape = 's32[1]{0}', space=sflag, size = 0x4, scoped, tag = 'scoped memory for tpu_custom_call.1']
    #allocation4 [shape = 's32[1]{0}', space=sflag, size = 0x4, scoped, tag = 'scoped memory for tpu_custom_call.1']
    #allocation5 [shape = 'u8[2048]{0}', space=vmem, size = 0x800, scoped, tag = 'input window, operand 3, single buffered']
    #allocation6 [shape = 's32[1]{0}', space=sflag, size = 0x4, scoped, tag = 'scoped memory for tpu_custom_call.1']
    #allocation7 [shape = 'u8[8192]{0}', space=vmem, size = 0x2000, scoped, tag = 'output window, operand 0, single buffered']
    %13 = vsyncpa [#allocation3], 0
    %14 = vsyncpa [#allocation6], 0
    %15 = vsyncpa [#allocation4], 0
    // Predicated region
    $region2: #{tpu_custom_call.1} parent=1 // pred_check
      _
    $region3: #{tpu_custom_call.1} parent=1 // pred_check_branch
      %17 = sbr.rel (0) target = $region5
    $region4: #{tpu_custom_call.1} parent=1 // pred_region
      _
    $region5: #{tpu_custom_call.1} parent=1 // pred_fallthru
      _
    // Predicated region
    $region6: #{tpu_custom_call.1} parent=1 // pred_check
      _
    $region7: #{tpu_custom_call.1} parent=1 // pred_check_branch
      %19 = sbr.rel (0) target = $region9
    $region8: #{tpu_custom_call.1} parent=1 // pred_region
      %s21 = ssub.s32 128, 128
      %22 = vsyncadd [#allocation3], %s21
      %s23 = sshll.u32 [#allocation2], 4
      %s24 = int_to_ptr.vmem [resolvable:$true] %s23
      %29 = dma.hbm_to_vmem [thread:$0]  %s1, 128, %s24, [#allocation3], 64, 64, 4
    $region9: #{tpu_custom_call.1} parent=1 // pred_fallthru
      _
    // Predicated region
    $region10: #{tpu_custom_call.1} parent=1 // pred_check
      _
    $region11: #{tpu_custom_call.1} parent=1 // pred_check_branch
      %31 = sbr.rel (0) target = $region13
    $region12: #{tpu_custom_call.1} parent=1 // pred_region
      _
    $region13: #{tpu_custom_call.1} parent=1 // pred_fallthru
      _
    // Predicated region
    $region14: #{tpu_custom_call.1} parent=1 // pred_check
      _
    $region15: #{tpu_custom_call.1} parent=1 // pred_check_branch
      %33 = sbr.rel (0) target = $region17
    $region16: #{tpu_custom_call.1} parent=1 // pred_region
      %s35 = ssub.s32 64, 64
      %36 = vsyncadd [#allocation6], %s35
      %s38 = sshll.u32 [#allocation5], 4
      %s39 = int_to_ptr.vmem [resolvable:$true] %s38
      %41 = dma.hbm_to_vmem [thread:$0]  %s3, 64, %s39, [#allocation6]
    $region17: #{tpu_custom_call.1} parent=1 // pred_fallthru
      _
    // Predicated region
    $region18: #{tpu_custom_call.1} parent=1 // pred_check
      _
    $region19: #{tpu_custom_call.1} parent=1 // pred_check_branch
      %43 = sbr.rel (0) target = $region21
    $region20: #{tpu_custom_call.1} parent=1 // pred_region
      _
    $region21: #{tpu_custom_call.1} parent=1 // pred_fallthru
      _
    // Predicated region
    $region22: #{tpu_custom_call.1} parent=1 // pred_check
      _
    $region23: #{tpu_custom_call.1} parent=1 // pred_check_branch
      %45 = sbr.rel (0) target = $region25
    $region24: #{tpu_custom_call.1} parent=1 // pred_region
      _
    $region25: #{tpu_custom_call.1} parent=1 // pred_fallthru
      _
    // Predicated region
    $region26: #{tpu_custom_call.1} parent=1 // pred_check
      _
    $region27: #{tpu_custom_call.1} parent=1 // pred_check_branch
      %47 = sbr.rel (0) target = $region29
    $region28: #{tpu_custom_call.1} parent=1 // pred_region
      _
    $region29: #{tpu_custom_call.1} parent=1 // pred_fallthru
      _
    // Predicated region
    $region30: #{tpu_custom_call.1} parent=1 // pred_check
      _
    $region31: #{tpu_custom_call.1} parent=1 // pred_check_branch
      %49 = sbr.rel (0) target = $region33
    $region32: #{tpu_custom_call.1} parent=1 // pred_region
      _
    $region33: #{tpu_custom_call.1} parent=1 // pred_fallthru
      _
    // Predicated region
    $region34: #{tpu_custom_call.1} parent=1 // pred_check
      _
    $region35: #{tpu_custom_call.1} parent=1 // pred_check_branch
      %51 = sbr.rel (0) target = $region37
    $region36: #{tpu_custom_call.1} parent=1 // pred_region
      %52 = dma.done [#allocation3], 128
    $region37: #{tpu_custom_call.1} parent=1 // pred_fallthru
      _
    // Predicated region
    $region38: #{tpu_custom_call.1} parent=1 // pred_check
      _
    $region39: #{tpu_custom_call.1} parent=1 // pred_check_branch
      %54 = sbr.rel (0) target = $region41
    $region40: #{tpu_custom_call.1} parent=1 // pred_region
      %55 = dma.done [#allocation6], 64
    $region41: #{tpu_custom_call.1} parent=1 // pred_fallthru
      _
    %v57 = vld [vmem:[%s0] sm:$0xff]
    %v58 = vld [vmem:[%s0 + $0x8] sm:$0xff]
    %vm59 = vcmask 261120
    %v60 = vsel %vm59, %v57, 0.0
    %v61 = vsel %vm59, %v58, 0.0
    %v62 = vld [vmem:[#allocation5] sm:$0xf]
    %v63 = vld [vmem:[%s2] sm:$0xf]
    %v64 = vld [vmem:[%s2 + $0x4] sm:$0xf]
    %v65 = vld [vmem:[%s2 + $0x8] sm:$0xf]
    %v66 = vld [vmem:[%s2 + $0xc] sm:$0xf]
    %v67 = vld [vmem:[%s2 + $0x10] sm:$0xf]
    %v68 = vld [vmem:[%s2 + $0x14] sm:$0xf]
    %v69 = vld [vmem:[%s2 + $0x18] sm:$0xf]
    %v70 = vld [vmem:[%s2 + $0x1c] sm:$0xf]
    %v71 = vld [vmem:[#allocation2] sm:$0xf]
    %v72 = vld [vmem:[#allocation2 + $0x4] sm:$0xf]
    %v73 = vmul.f32 %v60, %v60
    %v74 = vmul.f32 %v61, %v61
    %75 = vadd.xlane.f32.xlu0 %v73
    %v76 = vpop.xlane.xlu0 %75
    %77 = vadd.xlane.f32.xlu0 %v74
    %v78 = vpop.xlane.xlu0 %77
    %v79 = vmul.f32 %v76, 0.03125
    %v80 = vmul.f32 %v78, 0.03125
    %v81 = vadd.f32 %v79, 1e-05
    %v82 = vadd.f32 %v80, 1e-05
    %v83 = vrsqrt.pop %v81
    %v84 = vrsqrt.pop %v82
    %v85 = vmul.f32 %v60, %v83
    %v86 = vmul.f32 %v61, %v84
    %v87 = vlaneseq
    %v88 = vshrl.u32 %v87, 7
    %v89 = vsub.s32 0, %v88
    %v90 = vrot.slane %v62, %v89
    %v91 = vmul.f32 %v85, %v90
    %v92 = vmul.f32 %v86, %v90
    %v93 = vpack.c.bf16 %v92, %v91
    %v94 = vld [vmem:[%s4] sm:$0xf]
    %v95 = vld [vmem:[%s4 + $0x4] sm:$0xf]
    %v96 = vld [vmem:[%s4 + $0x8] sm:$0xf]
    %v97 = vld [vmem:[%s4 + $0xc] sm:$0xf]
    %v98 = vld [vmem:[%s4 + $0x10] sm:$0xf]
    %v99 = vld [vmem:[%s4 + $0x14] sm:$0xf]
    %v100 = vld [vmem:[%s4 + $0x18] sm:$0xf]
    %v101 = vld [vmem:[%s4 + $0x1c] sm:$0xf]
    %v102 = vld [vmem:[%s4 + $0x20] sm:$0xf]
    %v103 = vld [vmem:[%s4 + $0x24] sm:$0xf]
    %v104 = vld [vmem:[%s4 + $0x28] sm:$0xf]
    %v105 = vld [vmem:[%s4 + $0x2c] sm:$0xf]
    %v106 = vld [vmem:[%s4 + $0x30] sm:$0xf]
    %v107 = vld [vmem:[%s4 + $0x34] sm:$0xf]
    %v108 = vld [vmem:[%s4 + $0x38] sm:$0xf]
    %v109 = vld [vmem:[%s4 + $0x3c] sm:$0xf]
    %v126 = vunpack.c.l.b16 %v94
    %v127 = vunpack.c.l.b16 %v95
    %v128 = vunpack.c.l.b16 %v96
    %v129 = vunpack.c.l.b16 %v97
    %v130 = vunpack.c.l.b16 %v98
    %v131 = vunpack.c.l.b16 %v99
    %v132 = vunpack.c.l.b16 %v100
    %v133 = vunpack.c.l.b16 %v101
    %v134 = vunpack.c.l.b16 %v102
    %v135 = vunpack.c.l.b16 %v103
    %v136 = vunpack.c.l.b16 %v104
    %v137 = vunpack.c.l.b16 %v105
    %v138 = vunpack.c.l.b16 %v106
    %v139 = vunpack.c.l.b16 %v107
    %v140 = vunpack.c.l.b16 %v108
    %v141 = vunpack.c.l.b16 %v109
    %v142 = vpack.c.b16 %v127, %v126
    %v143 = vpack.c.b16 %v129, %v128
    %v144 = vpack.c.b16 %v131, %v130
    %v145 = vpack.c.b16 %v133, %v132
    %v146 = vpack.c.b16 %v135, %v134
    %v147 = vpack.c.b16 %v137, %v136
    %v148 = vpack.c.b16 %v139, %v138
    %v149 = vpack.c.b16 %v141, %v140
    %158 = vmatprep.subr.bf16.mxu0 0
    %159 = vmatpush1.bf16.msra.mxu0 %v142
    %160 = vmatprep.subr.bf16.mxu0 0
    %161 = vmatpush1.bf16.msra.mxu0 %v143
    %162 = vmatprep.subr.bf16.mxu0 0
    %163 = vmatpush1.bf16.msra.mxu0 %v144
    %164 = vmatprep.subr.bf16.mxu0 0
    %165 = vmatpush1.bf16.msra.mxu0 %v145
    %166 = vmatprep.subr.bf16.mxu0 0
    %167 = vmatpush1.bf16.msra.mxu0 %v146
    %168 = vmatprep.subr.bf16.mxu0 0
    %169 = vmatpush1.bf16.msra.mxu0 %v147
    %170 = vmatprep.subr.bf16.mxu0 0
    %171 = vmatpush1.bf16.msra.mxu0 %v148
    %172 = vmatprep.subr.bf16.mxu0 0
    %173 = vmatpush1.bf16.msra.mxu0 %v149
    %174 = vmatprep.subr.bf16.mxu0 0
    %175 = vmatpush1.bf16.msra.mxu0 0
    %176 = vmatprep.subr.bf16.mxu0 0
    %177 = vmatpush1.bf16.msra.mxu0 0
    %178 = vmatprep.subr.bf16.mxu0 0
    %179 = vmatpush1.bf16.msra.mxu0 0
    %180 = vmatprep.subr.bf16.mxu0 0
    %181 = vmatpush1.bf16.msra.mxu0 0
    %182 = vmatprep.subr.bf16.mxu0 0
    %183 = vmatpush1.bf16.msra.mxu0 0
    %184 = vmatprep.subr.bf16.mxu0 0
    %185 = vmatpush1.bf16.msra.mxu0 0
    %186 = vmatprep.subr.bf16.mxu0 0
    %187 = vmatpush1.bf16.msra.mxu0 0
    %188 = vmatprep.subr.bf16.mxu0 0
    %189 = vmatpush1.bf16.msra.mxu0 0
    %190 = vmatprep.mubr.bf16.mxu0 0
    %191 = vmatmul.mubr.bf16.gmra.mrb[0].mxu0 %v93
    %v192 = vpop.f32.mrb[0].mxu0
    %v193 = vadd.f32 0.0, %v192
    %v194 = vpop.f32.mrb[0].mxu0
    %v195 = vpop.f32.mrb[0].mxu0
    %v196 = vadd.f32 0.0, %v195
    %v197 = vpop.f32.mrb[0].mxu0
    %198 = vdwg.mxu0
    %v199 = vpack.c.bf16 %v196, %v193
    %v208 = vunpack.c.l.b16 %v63
    %v209 = vunpack.c.l.b16 %v64
    %v210 = vunpack.c.l.b16 %v65
    %v211 = vunpack.c.l.b16 %v66
    %v212 = vunpack.c.l.b16 %v67
    %v213 = vunpack.c.l.b16 %v68
    %v214 = vunpack.c.l.b16 %v69
    %v215 = vunpack.c.l.b16 %v70
    %v216 = vpack.c.b16 %v209, %v208
    %v217 = vpack.c.b16 %v211, %v210
    %v218 = vpack.c.b16 %v213, %v212
    %v219 = vpack.c.b16 %v215, %v214
    %220 = vrot.lane.b32.xlu0 %v216, 32
    %v221 = vpop.permute.xlu0 %220
    %222 = vrot.lane.b32.xlu0 %v217, 32
    %v223 = vpop.permute.xlu0 %222
    %224 = vrot.lane.b32.xlu0 %v218, 32
    %v225 = vpop.permute.xlu0 %224
    %226 = vrot.lane.b32.xlu0 %v219, 32
    %v227 = vpop.permute.xlu0 %226
    %v232 = vmul.bf16 %v199, %v221
    %v233 = vmul.bf16 %v199, %v223
    %v234 = vmul.bf16 %v199, %v225
    %v235 = vmul.bf16 %v199, %v227
    %236 = vrot.lane.b32.xlu0 %v216, 64
    %v237 = vpop.permute.xlu0 %236
    %238 = vrot.lane.b32.xlu0 %v217, 64
    %v239 = vpop.permute.xlu0 %238
    %240 = vrot.lane.b32.xlu0 %v218, 64
    %v241 = vpop.permute.xlu0 %240
    %242 = vrot.lane.b32.xlu0 %v219, 64
    %v243 = vpop.permute.xlu0 %242
    %v248 = vmul.bf16 %v199, %v237
    %v249 = vmul.bf16 %v199, %v239
    %v250 = vmul.bf16 %v199, %v241
    %v251 = vmul.bf16 %v199, %v243
    %v252 = vunpack.c.l.bf16 %v71
    %v253 = vunpack.c.l.bf16 %v72
    %258 = vrot.lane.b32.xlu0 %v232, 96
    %v259 = vpop.permute.xlu0 %258
    %260 = vrot.lane.b32.xlu0 %v233, 96
    %v261 = vpop.permute.xlu0 %260
    %262 = vrot.lane.b32.xlu0 %v234, 96
    %v263 = vpop.permute.xlu0 %262
    %264 = vrot.lane.b32.xlu0 %v235, 96
    %v265 = vpop.permute.xlu0 %264
    %v267 = vsel %vm59, %v199, 0
    %v270 = vsel %vm59, %v259, 0
    %v273 = vsel %vm59, %v261, 0
    %v276 = vsel %vm59, %v263, 0
    %v279 = vsel %vm59, %v265, 0
    %281 = vmatprep.subr.bf16.mxu0 0
    %282 = vmatpush1.bf16.xpose.msra.mxu0 %v270
    %283 = vmatprep.subr.bf16.mxu0 0
    %284 = vmatpush1.bf16.xpose.msra.mxu0 %v273
    %285 = vmatprep.subr.bf16.mxu0 0
    %286 = vmatpush1.bf16.xpose.msra.mxu0 %v276
    %287 = vmatprep.subr.bf16.mxu0 0
    %288 = vmatpush1.bf16.xpose.msra.mxu0 %v279
    %289 = vmatprep.subr.bf16.mxu0 0
    %290 = vmatpush1.bf16.xpose.msra.mxu0 0
    %291 = vmatprep.subr.bf16.mxu0 0
    %292 = vmatpush1.bf16.xpose.msra.mxu0 0
    %293 = vmatprep.subr.bf16.mxu0 0
    %294 = vmatpush1.bf16.xpose.msra.mxu0 0
    %295 = vmatprep.subr.bf16.mxu0 0
    %296 = vmatpush1.bf16.xpose.msra.mxu0 0
    %297 = vmatprep.subr.bf16.mxu0 0
    %298 = vmatpush1.bf16.xpose.msra.mxu0 0
    %299 = vmatprep.subr.bf16.mxu0 0
    %300 = vmatpush1.bf16.xpose.msra.mxu0 0
    %301 = vmatprep.subr.bf16.mxu0 0
    %302 = vmatpush1.bf16.xpose.msra.mxu0 0
    %303 = vmatprep.subr.bf16.mxu0 0
    %304 = vmatpush1.bf16.xpose.msra.mxu0 0
    %305 = vmatprep.subr.bf16.mxu0 0
    %306 = vmatpush1.bf16.xpose.msra.mxu0 0
    %307 = vmatprep.subr.bf16.mxu0 0
    %308 = vmatpush1.bf16.xpose.msra.mxu0 0
    %309 = vmatprep.subr.bf16.mxu0 0
    %310 = vmatpush1.bf16.xpose.msra.mxu0 0
    %311 = vmatprep.subr.bf16.mxu0 0
    %312 = vmatpush1.bf16.xpose.msra.mxu0 0
    %313 = vmatprep.mubr.bf16.mxu0 0
    %314 = vmatmul.mubr.bf16.gmra.mrb[0].mxu0 %v267
    %v315 = vpop.f32.mrb[0].mxu0
    %v316 = vadd.f32 %v252, %v315
    %v317 = vpop.f32.mrb[0].mxu0
    %v318 = vpop.f32.mrb[0].mxu0
    %v319 = vadd.f32 %v253, %v318
    %v320 = vpop.f32.mrb[0].mxu0
    %321 = vdwg.mxu0
    %vm322 = vcmask 130048
    %v323 = vsel %vm322, %v316, -inf
    %324 = vmax.xlane.f32.xlu0 %v323
    %v325 = vpop.xlane.xlu0 %324
    %v326 = vsel %vm322, %v319, -inf
    %327 = vmax.xlane.f32.xlu0 %v326
    %v328 = vpop.xlane.xlu0 %327
    %v329 = vsub.f32 %v316, %v325
    %v330 = vsub.f32 %v319, %v328
    %v331 = vmul.f32 %v329, 1.442695
    %v332 = vpow.pop %v331
    %v333 = vmul.f32 %v330, 1.442695
    %v334 = vpow.pop %v333
    %v335 = vsel %vm322, %v332, 0.0
    %336 = vadd.xlane.f32.xlu0 %v335
    %v337 = vpop.xlane.xlu0 %336
    %v338 = vsel %vm322, %v334, 0.0
    %339 = vadd.xlane.f32.xlu0 %v338
    %v340 = vpop.xlane.xlu0 %339
    %v341 = vrcp.pop %v337
    %v342 = vrcp.pop %v340
    %v343 = vmul.f32 %v332, %v341
    %v344 = vmul.f32 %v334, %v342
    %vm345 = vcmask 261248
    %v346 = vsel %vm345, %v316, -inf
    %347 = vmax.xlane.f32.xlu0 %v346
    %v348 = vpop.xlane.xlu0 %347
    %v349 = vsel %vm345, %v319, -inf
    %350 = vmax.xlane.f32.xlu0 %v349
    %v351 = vpop.xlane.xlu0 %350
    %v352 = vsub.f32 %v316, %v348
    %v353 = vsub.f32 %v319, %v351
    %v354 = vmul.f32 %v352, 1.442695
    %v355 = vpow.pop %v354
    %v356 = vmul.f32 %v353, 1.442695
    %v357 = vpow.pop %v356
    %360 = vrot.lane.b32.xlu0 %v355, 112
    %v361 = vpop.permute.xlu0 %360
    %362 = vrot.lane.b32.xlu0 %v357, 112
    %v363 = vpop.permute.xlu0 %362
    %v366 = vsel %vm322, %v361, 0.0
    %367 = vadd.xlane.f32.xlu0 %v366
    %v368 = vpop.xlane.xlu0 %367
    %v369 = vsel %vm322, %v363, 0.0
    %370 = vadd.xlane.f32.xlu0 %v369
    %v371 = vpop.xlane.xlu0 %370
    %v372 = vrcp.pop %v368
    %v373 = vrcp.pop %v371
    %v374 = vmul.f32 %v355, %v372
    %v375 = vmul.f32 %v357, %v373
    %vm376 = vcmask 392448
    %v377 = vsel %vm376, %v316, -inf
    %378 = vmax.xlane.f32.xlu0 %v377
    %v379 = vpop.xlane.xlu0 %378
    %v380 = vsel %vm376, %v319, -inf
    %381 = vmax.xlane.f32.xlu0 %v380
    %v382 = vpop.xlane.xlu0 %381
    %v383 = vsub.f32 %v316, %v379
    %v384 = vsub.f32 %v319, %v382
    %v385 = vmul.f32 %v383, 1.442695
    %v386 = vpow.pop %v385
    %v387 = vmul.f32 %v384, 1.442695
    %v388 = vpow.pop %v387
    %391 = vrot.lane.b32.xlu0 %v386, 96
    %v392 = vpop.permute.xlu0 %391
    %393 = vrot.lane.b32.xlu0 %v388, 96
    %v394 = vpop.permute.xlu0 %393
    %v397 = vsel %vm322, %v392, 0.0
    %398 = vadd.xlane.f32.xlu0 %v397
    %v399 = vpop.xlane.xlu0 %398
    %v400 = vsel %vm322, %v394, 0.0
    %401 = vadd.xlane.f32.xlu0 %v400
    %v402 = vpop.xlane.xlu0 %401
    %v403 = vrcp.pop %v399
    %v404 = vrcp.pop %v402
    %v405 = vmul.f32 %v386, %v403
    %v406 = vmul.f32 %v388, %v404
    %vm407 = vcmask 523648
    %v408 = vsel %vm407, %v316, -inf
    %409 = vmax.xlane.f32.xlu0 %v408
    %v410 = vpop.xlane.xlu0 %409
    %v411 = vsel %vm407, %v319, -inf
    %412 = vmax.xlane.f32.xlu0 %v411
    %v413 = vpop.xlane.xlu0 %412
    %v414 = vsub.f32 %v316, %v410
    %v415 = vsub.f32 %v319, %v413
    %v416 = vmul.f32 %v414, 1.442695
    %v417 = vpow.pop %v416
    %v418 = vmul.f32 %v415, 1.442695
    %v419 = vpow.pop %v418
    %422 = vrot.lane.b32.xlu0 %v417, 80
    %v423 = vpop.permute.xlu0 %422
    %424 = vrot.lane.b32.xlu0 %v419, 80
    %v425 = vpop.permute.xlu0 %424
    %v428 = vsel %vm322, %v423, 0.0
    %429 = vadd.xlane.f32.xlu0 %v428
    %v430 = vpop.xlane.xlu0 %429
    %v431 = vsel %vm322, %v425, 0.0
    %432 = vadd.xlane.f32.xlu0 %v431
    %v433 = vpop.xlane.xlu0 %432
    %v434 = vrcp.pop %v430
    %v435 = vrcp.pop %v433
    %v436 = vmul.f32 %v417, %v434
    %v437 = vmul.f32 %v419, %v435
    %v438 = vsel %vm322, %v343, %v374
    %v439 = vsel %vm322, %v344, %v375
    %v440 = vsel %vm59, %v438, %v405
    %v441 = vsel %vm59, %v439, %v406
    %vm442 = vcmask 392192
    %v443 = vsel %vm442, %v440, %v436
    %v444 = vsel %vm442, %v441, %v437
    %v445 = vpack.c.bf16 %v444, %v443
    %450 = vrot.lane.b32.xlu0 %v248, 64
    %v451 = vpop.permute.xlu0 %450
    %452 = vrot.lane.b32.xlu0 %v249, 64
    %v453 = vpop.permute.xlu0 %452
    %454 = vrot.lane.b32.xlu0 %v250, 64
    %v455 = vpop.permute.xlu0 %454
    %456 = vrot.lane.b32.xlu0 %v251, 64
    %v457 = vpop.permute.xlu0 %456
    %vm462 = vcmask 523264
    %v464 = vsel %vm462, %v445, 0
    %466 = vmatprep.subr.bf16.mxu0 0
    %467 = vmatpush1.bf16.msra.mxu0 %v451
    %468 = vmatprep.subr.bf16.mxu0 0
    %469 = vmatpush1.bf16.msra.mxu0 %v453
    %470 = vmatprep.subr.bf16.mxu0 0
    %471 = vmatpush1.bf16.msra.mxu0 %v455
    %472 = vmatprep.subr.bf16.mxu0 0
    %473 = vmatpush1.bf16.msra.mxu0 %v457
    %474 = vmatprep.subr.bf16.mxu0 0
    %475 = vmatpush1.bf16.msra.mxu0 0
    %476 = vmatprep.subr.bf16.mxu0 0
    %477 = vmatpush1.bf16.msra.mxu0 0
    %478 = vmatprep.subr.bf16.mxu0 0
    %479 = vmatpush1.bf16.msra.mxu0 0
    %480 = vmatprep.subr.bf16.mxu0 0
    %481 = vmatpush1.bf16.msra.mxu0 0
    %482 = vmatprep.subr.bf16.mxu0 0
    %483 = vmatpush1.bf16.msra.mxu0 0
    %484 = vmatprep.subr.bf16.mxu0 0
    %485 = vmatpush1.bf16.msra.mxu0 0
    %486 = vmatprep.subr.bf16.mxu0 0
    %487 = vmatpush1.bf16.msra.mxu0 0
    %488 = vmatprep.subr.bf16.mxu0 0
    %489 = vmatpush1.bf16.msra.mxu0 0
    %490 = vmatprep.subr.bf16.mxu0 0
    %491 = vmatpush1.bf16.msra.mxu0 0
    %492 = vmatprep.subr.bf16.mxu0 0
    %493 = vmatpush1.bf16.msra.mxu0 0
    %494 = vmatprep.subr.bf16.mxu0 0
    %495 = vmatpush1.bf16.msra.mxu0 0
    %496 = vmatprep.subr.bf16.mxu0 0
    %497 = vmatpush1.bf16.msra.mxu0 0
    %498 = vmatprep.mubr.bf16.mxu0 0
    %499 = vmatmul.mubr.bf16.gmra.mrb[0].mxu0 %v464
    %v500 = vpop.f32.mrb[0].mxu0
    %v501 = vadd.f32 0.0, %v500
    %v502 = vpop.f32.mrb[0].mxu0
    %v503 = vpop.f32.mrb[0].mxu0
    %v504 = vadd.f32 0.0, %v503
    %v505 = vpop.f32.mrb[0].mxu0
    %506 = vdwg.mxu0
    %v507 = vpack.c.bf16 %v504, %v501
    %v508 = vld [vmem:[%s5] sm:$0xf]
    %v509 = vld [vmem:[%s5 + $0x4] sm:$0xf]
    %v510 = vld [vmem:[%s5 + $0x8] sm:$0xf]
    %v511 = vld [vmem:[%s5 + $0xc] sm:$0xf]
    %v516 = vunpack.c.l.b16 %v508
    %v517 = vunpack.c.l.b16 %v509
    %v518 = vunpack.c.l.b16 %v510
    %v519 = vunpack.c.l.b16 %v511
    %v520 = vpack.c.b16 %v517, %v516
    %v521 = vpack.c.b16 %v519, %v518
    %v525 = vsel %vm59, %v507, 0
    %527 = vmatprep.subr.bf16.mxu0 0
    %528 = vmatpush1.bf16.msra.mxu0 %v520
    %529 = vmatprep.subr.bf16.mxu0 0
    %530 = vmatpush1.bf16.msra.mxu0 %v521
    %531 = vmatprep.subr.bf16.mxu0 0
    %532 = vmatpush1.bf16.msra.mxu0 0
    %533 = vmatprep.subr.bf16.mxu0 0
    %534 = vmatpush1.bf16.msra.mxu0 0
    %535 = vmatprep.subr.bf16.mxu0 0
    %536 = vmatpush1.bf16.msra.mxu0 0
    %537 = vmatprep.subr.bf16.mxu0 0
    %538 = vmatpush1.bf16.msra.mxu0 0
    %539 = vmatprep.subr.bf16.mxu0 0
    %540 = vmatpush1.bf16.msra.mxu0 0
    %541 = vmatprep.subr.bf16.mxu0 0
    %542 = vmatpush1.bf16.msra.mxu0 0
    %543 = vmatprep.subr.bf16.mxu0 0
    %544 = vmatpush1.bf16.msra.mxu0 0
    %545 = vmatprep.subr.bf16.mxu0 0
    %546 = vmatpush1.bf16.msra.mxu0 0
    %547 = vmatprep.subr.bf16.mxu0 0
    %548 = vmatpush1.bf16.msra.mxu0 0
    %549 = vmatprep.subr.bf16.mxu0 0
    %550 = vmatpush1.bf16.msra.mxu0 0
    %551 = vmatprep.subr.bf16.mxu0 0
    %552 = vmatpush1.bf16.msra.mxu0 0
    %553 = vmatprep.subr.bf16.mxu0 0
    %554 = vmatpush1.bf16.msra.mxu0 0
    %555 = vmatprep.subr.bf16.mxu0 0
    %556 = vmatpush1.bf16.msra.mxu0 0
    %557 = vmatprep.subr.bf16.mxu0 0
    %558 = vmatpush1.bf16.msra.mxu0 0
    %559 = vmatprep.mubr.bf16.mxu0 0
    %560 = vmatmul.mubr.bf16.gmra.mrb[0].mxu0 %v525
    %v561 = vpop.f32.mrb[0].mxu0
    %v562 = vadd.f32 0.0, %v561
    %v563 = vpop.f32.mrb[0].mxu0
    %v564 = vpop.f32.mrb[0].mxu0
    %v565 = vadd.f32 0.0, %v564
    %v566 = vpop.f32.mrb[0].mxu0
    %567 = vdwg.mxu0
    %v568 = vlaneseq
    %v569 = vshrl.u32 %v568, 7
    %v570 = vsub.s32 2, %v569
    %v571 = vrot.slane %v62, %v570
    %v572 = vmul.f32 %v571, %v562
    %v573 = vmul.f32 %v571, %v565
    %v574 = vadd.f32 %v60, %v572
    %v575 = vadd.f32 %v61, %v573
    %v576 = vmul.f32 %v574, %v574
    %v577 = vmul.f32 %v575, %v575
    %578 = vadd.xlane.f32.xlu0 %v576
    %v579 = vpop.xlane.xlu0 %578
    %580 = vadd.xlane.f32.xlu0 %v577
    %v581 = vpop.xlane.xlu0 %580
    %v582 = vmul.f32 %v579, 0.03125
    %v583 = vmul.f32 %v581, 0.03125
    %v584 = vadd.f32 %v582, 1e-05
    %v585 = vadd.f32 %v583, 1e-05
    %v586 = vrsqrt.pop %v584
    %v587 = vrsqrt.pop %v585
    %v588 = vmul.f32 %v574, %v586
    %v589 = vmul.f32 %v575, %v587
    %v590 = vlaneseq
    %v591 = vshrl.u32 %v590, 7
    %v592 = vsub.s32 1, %v591
    %v593 = vrot.slane %v62, %v592
    %v594 = vmul.f32 %v588, %v593
    %v595 = vmul.f32 %v589, %v593
    %v596 = vpack.c.bf16 %v595, %v594
    %v597 = vld [vmem:[%s6] sm:$0xf]
    %v598 = vld [vmem:[%s6 + $0x4] sm:$0xf]
    %v599 = vld [vmem:[%s6 + $0x8] sm:$0xf]
    %v600 = vld [vmem:[%s6 + $0xc] sm:$0xf]
    %v601 = vld [vmem:[%s6 + $0x10] sm:$0xf]
    %v602 = vld [vmem:[%s6 + $0x14] sm:$0xf]
    %v603 = vld [vmem:[%s6 + $0x18] sm:$0xf]
    %v604 = vld [vmem:[%s6 + $0x1c] sm:$0xf]
    %v605 = vld [vmem:[%s6 + $0x20] sm:$0xf]
    %v606 = vld [vmem:[%s6 + $0x24] sm:$0xf]
    %v607 = vld [vmem:[%s6 + $0x28] sm:$0xf]
    %v608 = vld [vmem:[%s6 + $0x2c] sm:$0xf]
    %v609 = vld [vmem:[%s6 + $0x30] sm:$0xf]
    %v610 = vld [vmem:[%s6 + $0x34] sm:$0xf]
    %v611 = vld [vmem:[%s6 + $0x38] sm:$0xf]
    %v612 = vld [vmem:[%s6 + $0x3c] sm:$0xf]
    %v629 = vunpack.c.l.b16 %v597
    %v630 = vunpack.c.l.b16 %v598
    %v631 = vunpack.c.l.b16 %v599
    %v632 = vunpack.c.l.b16 %v600
    %v633 = vunpack.c.l.b16 %v601
    %v634 = vunpack.c.l.b16 %v602
    %v635 = vunpack.c.l.b16 %v603
    %v636 = vunpack.c.l.b16 %v604
    %v637 = vunpack.c.l.b16 %v605
    %v638 = vunpack.c.l.b16 %v606
    %v639 = vunpack.c.l.b16 %v607
    %v640 = vunpack.c.l.b16 %v608
    %v641 = vunpack.c.l.b16 %v609
    %v642 = vunpack.c.l.b16 %v610
    %v643 = vunpack.c.l.b16 %v611
    %v644 = vunpack.c.l.b16 %v612
    %v645 = vpack.c.b16 %v630, %v629
    %v646 = vpack.c.b16 %v632, %v631
    %v647 = vpack.c.b16 %v634, %v633
    %v648 = vpack.c.b16 %v636, %v635
    %v649 = vpack.c.b16 %v638, %v637
    %v650 = vpack.c.b16 %v640, %v639
    %v651 = vpack.c.b16 %v642, %v641
    %v652 = vpack.c.b16 %v644, %v643
    %661 = vmatprep.subr.bf16.mxu0 0
    %662 = vmatpush1.bf16.msra.mxu0 %v645
    %663 = vmatprep.subr.bf16.mxu0 0
    %664 = vmatpush1.bf16.msra.mxu0 %v646
    %665 = vmatprep.subr.bf16.mxu0 0
    %666 = vmatpush1.bf16.msra.mxu0 %v647
    %667 = vmatprep.subr.bf16.mxu0 0
    %668 = vmatpush1.bf16.msra.mxu0 %v648
    %669 = vmatprep.subr.bf16.mxu0 0
    %670 = vmatpush1.bf16.msra.mxu0 %v649
    %671 = vmatprep.subr.bf16.mxu0 0
    %672 = vmatpush1.bf16.msra.mxu0 %v650
    %673 = vmatprep.subr.bf16.mxu0 0
    %674 = vmatpush1.bf16.msra.mxu0 %v651
    %675 = vmatprep.subr.bf16.mxu0 0
    %676 = vmatpush1.bf16.msra.mxu0 %v652
    %677 = vmatprep.subr.bf16.mxu0 0
    %678 = vmatpush1.bf16.msra.mxu0 0
    %679 = vmatprep.subr.bf16.mxu0 0
    %680 = vmatpush1.bf16.msra.mxu0 0
    %681 = vmatprep.subr.bf16.mxu0 0
    %682 = vmatpush1.bf16.msra.mxu0 0
    %683 = vmatprep.subr.bf16.mxu0 0
    %684 = vmatpush1.bf16.msra.mxu0 0
    %685 = vmatprep.subr.bf16.mxu0 0
    %686 = vmatpush1.bf16.msra.mxu0 0
    %687 = vmatprep.subr.bf16.mxu0 0
    %688 = vmatpush1.bf16.msra.mxu0 0
    %689 = vmatprep.subr.bf16.mxu0 0
    %690 = vmatpush1.bf16.msra.mxu0 0
    %691 = vmatprep.subr.bf16.mxu0 0
    %692 = vmatpush1.bf16.msra.mxu0 0
    %693 = vmatprep.mubr.bf16.mxu0 0
    %694 = vmatmul.mubr.bf16.gmra.mrb[0].mxu0 %v596
    %v695 = vpop.f32.mrb[0].mxu0
    %v696 = vadd.f32 0.0, %v695
    %v697 = vpop.f32.mrb[0].mxu0
    %v698 = vpop.f32.mrb[0].mxu0
    %v699 = vadd.f32 0.0, %v698
    %v700 = vpop.f32.mrb[0].mxu0
    %701 = vdwg.mxu0
    %v702 = vxor.u32 %v696, 2147483648
    %v703 = vxor.u32 %v699, 2147483648
    %v704 = vmul.f32 %v702, 1.442695
    %v705 = vpow.pop %v704
    %v706 = vmul.f32 %v703, 1.442695
    %v707 = vpow.pop %v706
    %v708 = vadd.f32 %v705, 1.0
    %v709 = vadd.f32 %v707, 1.0
    %v710 = vrcp.pop %v708
    %v711 = vmul.f32 1.0, %v710
    %v712 = vrcp.pop %v709
    %v713 = vmul.f32 1.0, %v712
    %v714 = vmul.f32 %v696, %v711
    %v715 = vmul.f32 %v699, %v713
    %718 = vrot.lane.b32.xlu0 %v696, 64
    %v719 = vpop.permute.xlu0 %718
    %720 = vrot.lane.b32.xlu0 %v699, 64
    %v721 = vpop.permute.xlu0 %720
    %v724 = vmul.f32 %v714, %v719
    %v725 = vmul.f32 %v715, %v721
    %v726 = vpack.c.bf16 %v725, %v724
    %v727 = vld [vmem:[%s7] sm:$0xf]
    %v728 = vld [vmem:[%s7 + $0x4] sm:$0xf]
    %v729 = vld [vmem:[%s7 + $0x8] sm:$0xf]
    %v730 = vld [vmem:[%s7 + $0xc] sm:$0xf]
    %v731 = vld [vmem:[%s7 + $0x10] sm:$0xf]
    %v732 = vld [vmem:[%s7 + $0x14] sm:$0xf]
    %v733 = vld [vmem:[%s7 + $0x18] sm:$0xf]
    %v734 = vld [vmem:[%s7 + $0x1c] sm:$0xf]
    %v743 = vunpack.c.l.b16 %v727
    %v744 = vunpack.c.l.b16 %v728
    %v745 = vunpack.c.l.b16 %v729
    %v746 = vunpack.c.l.b16 %v730
    %v747 = vunpack.c.l.b16 %v731
    %v748 = vunpack.c.l.b16 %v732
    %v749 = vunpack.c.l.b16 %v733
    %v750 = vunpack.c.l.b16 %v734
    %v751 = vpack.c.b16 %v744, %v743
    %v752 = vpack.c.b16 %v746, %v745
    %v753 = vpack.c.b16 %v748, %v747
    %v754 = vpack.c.b16 %v750, %v749
    %v760 = vsel %vm462, %v726, 0
    %762 = vmatprep.subr.bf16.mxu0 0
    %763 = vmatpush1.bf16.msra.mxu0 %v751
    %764 = vmatprep.subr.bf16.mxu0 0
    %765 = vmatpush1.bf16.msra.mxu0 %v752
    %766 = vmatprep.subr.bf16.mxu0 0
    %767 = vmatpush1.bf16.msra.mxu0 %v753
    %768 = vmatprep.subr.bf16.mxu0 0
    %769 = vmatpush1.bf16.msra.mxu0 %v754
    %770 = vmatprep.subr.bf16.mxu0 0
    %771 = vmatpush1.bf16.msra.mxu0 0
    %772 = vmatprep.subr.bf16.mxu0 0
    %773 = vmatpush1.bf16.msra.mxu0 0
    %774 = vmatprep.subr.bf16.mxu0 0
    %775 = vmatpush1.bf16.msra.mxu0 0
    %776 = vmatprep.subr.bf16.mxu0 0
    %777 = vmatpush1.bf16.msra.mxu0 0
    %778 = vmatprep.subr.bf16.mxu0 0
    %779 = vmatpush1.bf16.msra.mxu0 0
    %780 = vmatprep.subr.bf16.mxu0 0
    %781 = vmatpush1.bf16.msra.mxu0 0
    %782 = vmatprep.subr.bf16.mxu0 0
    %783 = vmatpush1.bf16.msra.mxu0 0
    %784 = vmatprep.subr.bf16.mxu0 0
    %785 = vmatpush1.bf16.msra.mxu0 0
    %786 = vmatprep.subr.bf16.mxu0 0
    %787 = vmatpush1.bf16.msra.mxu0 0
    %788 = vmatprep.subr.bf16.mxu0 0
    %789 = vmatpush1.bf16.msra.mxu0 0
    %790 = vmatprep.subr.bf16.mxu0 0
    %791 = vmatpush1.bf16.msra.mxu0 0
    %792 = vmatprep.subr.bf16.mxu0 0
    %793 = vmatpush1.bf16.msra.mxu0 0
    %794 = vmatprep.mubr.bf16.mxu0 0
    %795 = vmatmul.mubr.bf16.gmra.mrb[0].mxu0 %v760
    %v796 = vpop.f32.mrb[0].mxu0
    %v797 = vadd.f32 0.0, %v796
    %v798 = vpop.f32.mrb[0].mxu0
    %v799 = vpop.f32.mrb[0].mxu0
    %v800 = vadd.f32 0.0, %v799
    %v801 = vpop.f32.mrb[0].mxu0
    %802 = vdwg.mxu0
    %v803 = vlaneseq
    %v804 = vshrl.u32 %v803, 7
    %v805 = vsub.s32 3, %v804
    %v806 = vrot.slane %v62, %v805
    %v807 = vmul.f32 %v806, %v797
    %v808 = vmul.f32 %v806, %v800
    %v809 = vadd.f32 %v574, %v807
    %v810 = vadd.f32 %v575, %v808
    %811 = vst [vmem:[#allocation7] sm:$0xff] %v809
    %812 = vst [vmem:[#allocation7 + $0x8] sm:$0xff] %v810
    // Predicated region
    $region42: #{tpu_custom_call.1} parent=1 // pred_check
      _
    $region43: #{tpu_custom_call.1} parent=1 // pred_check_branch
      %814 = sbr.rel (0) target = $region45
    $region44: #{tpu_custom_call.1} parent=1 // pred_region
      %s816 = ssub.s32 256, 256
      %817 = vsyncadd [#allocation4], %s816
      %s818 = sshll.u32 [#allocation7], 4
      %s819 = int_to_ptr.vmem [resolvable:$true] %s818
      %824 = dma.vmem_to_hbm [thread:$0]  %s819, 256, %s8, [#allocation4], 128, 128, 8
    $region45: #{tpu_custom_call.1} parent=1 // pred_fallthru
      _
    // Predicated region
    $region46: #{tpu_custom_call.1} parent=1 // pred_check
      _
    $region47: #{tpu_custom_call.1} parent=1 // pred_check_branch
      %826 = sbr.rel (0) target = $region49
    $region48: #{tpu_custom_call.1} parent=1 // pred_region
      %827 = dma.done [#allocation4], 256
    $region49: #{tpu_custom_call.1} parent=1 // pred_fallthru
      _
    %828 = vsyncpa [#allocation3], 1
    %829 = vsyncpa [#allocation6], 1
    %830 = vsyncpa [#allocation4], 1

</llo_original>
